<compile_context>
chip_gen: v7x
topology: tpu7x:2x2x1
jax: 0.10.0
libtpu: 0.0.40
codegen_flags: <defaults>
</compile_context>

<pallas_src>
import functools

import numpy as np
import jax
import jax.numpy as jnp
from jax.experimental import pallas as pl
from jax.experimental.pallas import tpu as pltpu


def _round_up(x, m):
    return (x + m - 1) // m * m


# ----------------------------- Pallas kernel -------------------------------

def tv_kernel(x_ref, wmask_ref, h_ref, w_ref, *,
              W, L, R, block_rows, mask_rows, compute_h, compute_w):
    """Partial TV sums for one block of flattened channel-image rows.

    x_ref     : (block_rows, L) in the input's native dtype.
    wmask_ref : (1, max(L-1, 1)) f32 {0,1}; zero where the (j, j+1) pair would
                cross an image-row boundary (j % W == W-1).
    h_ref/w_ref : (1, 1, 1) f32 per-block partial sums.
    """
    x = x_ref[...].astype(jnp.float32)

    if mask_rows:
        # Tail block: rows past R hold stale VMEM data -> select them to zero.
        row = (pl.program_id(0) * block_rows
               + jax.lax.broadcasted_iota(jnp.int32, (block_rows, 1), 0))
        x = jnp.where(row < R, x, 0.0)

    if compute_h:
        # Vertical neighbours: flat indices (j, j+W).  Every j in [0, L-W) is
        # a valid pair exactly once -> no mask required.
        dh = x[:, W:] - x[:, : L - W]
        h_ref[0] = jnp.sum(dh * dh, keepdims=True)
    else:
        h_ref[0] = jnp.zeros((1, 1), jnp.float32)

    if compute_w:
        # Horizontal neighbours: flat indices (j, j+1); pairs that cross the
        # image-row boundary are removed by the precomputed static mask.
        dw = (x[:, 1:] - x[:, : L - 1]) * wmask_ref[...]
        w_ref[0] = jnp.sum(dw * dw, keepdims=True)
    else:
        w_ref[0] = jnp.zeros((1, 1), jnp.float32)


# ----------------------------- wrapper --------------------------------------

def tv_loss_pallas(x, tv_loss_weight=1.0, block_rows=None):
    """TVLoss.forward: weight * 2 * (h_tv/count_h + w_tv/count_w) / b."""
    b, c, h, w = x.shape
    R = b * c
    L = h * w

    # Lane-dense view: one (b, c) channel image per row.  reshape of a
    # contiguous NCHW tensor is free (no copy); native dtype kept through HBM.
    xf = x.reshape(R, L)

    itemsize = jnp.dtype(x.dtype).itemsize
    if block_rows is None:
        # ~2 MiB of input per block (pipeline double-buffers it).
        block_rows = max(1, (2 * 1024 * 1024) // (L * itemsize))
    block_rows = max(8, (block_rows // 8) * 8)        # multiple of 8 sublanes
    block_rows = min(block_rows, _round_up(R, 8))
    grid = pl.cdiv(R, block_rows)
    mask_rows = (R % block_rows) != 0

    # Static {0,1} lane mask for W-direction pairs, built with numpy so it is
    # a compile-time constant (no runtime iota / modulo anywhere).
    wmask_len = max(L - 1, 1)
    wmask = (np.arange(wmask_len) % w != w - 1).astype(np.float32)
    wmask = wmask.reshape(1, wmask_len)

    kernel = functools.partial(
        tv_kernel, W=w, L=L, R=R, block_rows=block_rows, mask_rows=mask_rows,
        compute_h=(h > 1), compute_w=(w > 1))

    h_parts, w_parts = pl.pallas_call(
        kernel,
        out_shape=(jax.ShapeDtypeStruct((grid, 1, 1), jnp.float32),
                   jax.ShapeDtypeStruct((grid, 1, 1), jnp.float32)),
        grid_spec=pltpu.PrefetchScalarGridSpec(
            num_scalar_prefetch=0,
            grid=(grid,),
            in_specs=[pl.BlockSpec((block_rows, L), lambda i: (i, 0)),
                      pl.BlockSpec((1, wmask_len), lambda i: (0, 0))],
            out_specs=(pl.BlockSpec((1, 1, 1), lambda i: (i, 0, 0)),
                       pl.BlockSpec((1, 1, 1), lambda i: (i, 0, 0))),
        ),
        compiler_params=pltpu.CompilerParams(
            # Independent blocks -> both TensorCores on v7x; harmless on 1-TC.
            dimension_semantics=("parallel",),
            vmem_limit_bytes=32 * 1024 * 1024,
        ),
    )(xf, wmask)

    h_tv = jnp.sum(h_parts)
    w_tv = jnp.sum(w_parts)
    count_h = c * (h - 1) * w      # zero when h == 1 -> NaN, same as reference
    count_w = c * h * (w - 1)      # zero when w == 1 -> NaN, same as reference
    return tv_loss_weight * 2.0 * (h_tv / count_h + w_tv / count_w) / b


# ----------------------------- reference -------------------------------------

def tv_loss_ref(x, tv_loss_weight=1.0):
    b, c, h, w = x.shape
    count_h = c * (h - 1) * w
    count_w = c * h * (w - 1)
    h_tv = jnp.sum((x[:, :, 1:, :] - x[:, :, :h - 1, :]) ** 2)
    w_tv = jnp.sum((x[:, :, :, 1:] - x[:, :, :, :w - 1]) ** 2)
    return tv_loss_weight * 2.0 * (h_tv / count_h + w_tv / count_w) / b


# ----------------------------- main ------------------------------------------

if __name__ == "__main__":
    key = jax.random.PRNGKey(0)
    k1, k2, k3 = jax.random.split(key, 3)

    # shapes consistent with the module's NCHW input
    x = jax.random.uniform(k1, (2, 4, 16, 16), jnp.float32)
    out = jax.jit(tv_loss_pallas)(x)
    jax.block_until_ready(out)
    ref = tv_loss_ref(x)
    assert jnp.isfinite(out)
    assert jnp.allclose(out, ref, rtol=1e-5, atol=1e-6), (out, ref)

    # multi-block "parallel" grid with a ragged tail (64 rows, 24-row blocks)
    x2 = jax.random.uniform(k2, (4, 16, 32, 32), jnp.float32)
    out2 = jax.jit(functools.partial(tv_loss_pallas, block_rows=24))(x2)
    jax.block_until_ready(out2)
    ref2 = tv_loss_ref(x2)
    assert jnp.allclose(out2, ref2, rtol=1e-5, atol=1e-6), (out2, ref2)

    # native bf16 stays bf16 through HBM; the f32 cast happens in-kernel
    x3 = jax.random.uniform(k3, (2, 4, 16, 16), jnp.float32).astype(jnp.bfloat16)
    out3 = jax.jit(tv_loss_pallas)(x3)
    jax.block_until_ready(out3)
    ref3 = tv_loss_ref(x3.astype(jnp.float32))
    assert jnp.allclose(out3, ref3, rtol=1e-5, atol=1e-6), (out3, ref3)

    print("KERNEL_OK")
</pallas_src>

<mosaic_0001>
module attributes {stable_mosaic.version = 11 : i64} {
  func.func @tv_kernel(%arg0: i32, %arg1: memref<8x256xf32, #tpu.memory_space<vmem>>, %arg2: memref<1x255xf32, #tpu.memory_space<vmem>>, %arg3: memref<1x1x1xf32, #tpu.memory_space<vmem>>, %arg4: memref<1x1x1xf32, #tpu.memory_space<vmem>>) attributes {dimension_semantics = [#tpu.dimension_semantics<parallel>], iteration_bounds = array<i64: 1>, scalar_prefetch = 0 : i64, scratch_operands = 0 : i64, tpu.core_type = #tpu.core_type<tc>, window_params = [{transform_indices = @transform_0, window_bounds = array<i64: 8, 256>}, {pipeline_mode = #tpu.pipeline_mode<synchronous>, transform_indices = @transform_1, window_bounds = array<i64: 1, 255>}, {transform_indices = @transform_2, window_bounds = array<i64: 1, 1, 1>}, {transform_indices = @transform_3, window_bounds = array<i64: 1, 1, 1>}]} {
    %c0 = arith.constant 0 : index
    %c0_0 = arith.constant 0 : index
    %0 = vector.load %arg1[%c0, %c0_0] : memref<8x256xf32, #tpu.memory_space<vmem>>, vector<8x256xf32>
    %1 = vector.extract_strided_slice %0 {offsets = [0, 16], sizes = [8, 240], strides = [1, 1]} : vector<8x256xf32> to vector<8x240xf32>
    %2 = vector.extract_strided_slice %0 {offsets = [0, 0], sizes = [8, 240], strides = [1, 1]} : vector<8x256xf32> to vector<8x240xf32>
    %3 = arith.subf %1, %2 : vector<8x240xf32>
    %4 = arith.mulf %3, %3 : vector<8x240xf32>
    %5 = vector.shape_cast %4 : vector<8x240xf32> to vector<1x8x240xf32>
    %cst = arith.constant dense<0.000000e+00> : vector<1xf32>
    %6 = vector.multi_reduction <add>, %5, %cst [1, 2] : vector<1x8x240xf32> to vector<1xf32>
    %7 = vector.shape_cast %6 : vector<1xf32> to vector<1x1x1xf32>
    %8 = vector.extract %7[0, 0, 0] : f32 from vector<1x1x1xf32>
    %9 = vector.broadcast %8 : f32 to vector<1x1xf32>
    %c0_1 = arith.constant 0 : index
    %c0_2 = arith.constant 0 : index
    %c0_3 = arith.constant 0 : index
    %10 = vector.load %arg3[%c0_1, %c0_2, %c0_3] : memref<1x1x1xf32, #tpu.memory_space<vmem>>, vector<1x1x1xf32>
    %11 = vector.shape_cast %10 : vector<1x1x1xf32> to vector<1x1xf32>
    %12 = vector.shape_cast %9 : vector<1x1xf32> to vector<1x1x1xf32>
    tpu.vector_store %arg3[%c0_1, %c0_2, %c0_3], %12 {strides = array<i32>} : memref<1x1x1xf32, #tpu.memory_space<vmem>>, vector<1x1x1xf32>,
    %13 = vector.extract_strided_slice %0 {offsets = [0, 1], sizes = [8, 255], strides = [1, 1]} : vector<8x256xf32> to vector<8x255xf32>
    %14 = vector.extract_strided_slice %0 {offsets = [0, 0], sizes = [8, 255], strides = [1, 1]} : vector<8x256xf32> to vector<8x255xf32>
    %15 = arith.subf %13, %14 : vector<8x255xf32>
    %c0_4 = arith.constant 0 : index
    %c0_5 = arith.constant 0 : index
    %16 = vector.load %arg2[%c0_4, %c0_5] : memref<1x255xf32, #tpu.memory_space<vmem>>, vector<1x255xf32>
    %17 = vector.broadcast %16 : vector<1x255xf32> to vector<8x255xf32>
    %18 = arith.mulf %15, %17 : vector<8x255xf32>
    %19 = arith.mulf %18, %18 : vector<8x255xf32>
    %20 = vector.shape_cast %19 : vector<8x255xf32> to vector<1x8x255xf32>
    %cst_6 = arith.constant dense<0.000000e+00> : vector<1xf32>
    %21 = vector.multi_reduction <add>, %20, %cst_6 [1, 2] : vector<1x8x255xf32> to vector<1xf32>
    %22 = vector.shape_cast %21 : vector<1xf32> to vector<1x1x1xf32>
    %23 = vector.extract %22[0, 0, 0] : f32 from vector<1x1x1xf32>
    %24 = vector.broadcast %23 : f32 to vector<1x1xf32>
    %c0_7 = arith.constant 0 : index
    %c0_8 = arith.constant 0 : index
    %c0_9 = arith.constant 0 : index
    %25 = vector.load %arg4[%c0_7, %c0_8, %c0_9] : memref<1x1x1xf32, #tpu.memory_space<vmem>>, vector<1x1x1xf32>
    %26 = vector.shape_cast %25 : vector<1x1x1xf32> to vector<1x1xf32>
    %27 = vector.shape_cast %24 : vector<1x1xf32> to vector<1x1x1xf32>
    tpu.vector_store %arg4[%c0_7, %c0_8, %c0_9], %27 {strides = array<i32>} : memref<1x1x1xf32, #tpu.memory_space<vmem>>, vector<1x1x1xf32>,
    return
  }
  func.func @transform_0(%arg0: i32) -> (i32, i32) {
    %c0_i32 = arith.constant 0 : i32
    %c0_i32_0 = arith.constant 0 : i32
    return %arg0, %c0_i32 : i32, i32
  }
  func.func @transform_1(%arg0: i32) -> (i32, i32) {
    %c0_i32 = arith.constant 0 : i32
    %c0_i32_0 = arith.constant 0 : i32
    %c0_i32_1 = arith.constant 0 : i32
    return %c0_i32, %c0_i32_0 : i32, i32
  }
  func.func @transform_2(%arg0: i32) -> (i32, i32, i32) {
    %c0_i32 = arith.constant 0 : i32
    %c0_i32_0 = arith.constant 0 : i32
    %c0_i32_1 = arith.constant 0 : i32
    return %arg0, %c0_i32, %c0_i32_0 : i32, i32, i32
  }
  func.func @transform_3(%arg0: i32) -> (i32, i32, i32) {
    %c0_i32 = arith.constant 0 : i32
    %c0_i32_0 = arith.constant 0 : i32
    %c0_i32_1 = arith.constant 0 : i32
    return %arg0, %c0_i32, %c0_i32_0 : i32, i32, i32
  }
}

</mosaic_0001>

<llo_original>
// kernel: tv_loss_pallas.1
$region0: #{tv_loss_pallas.1}
  #allocation0 [shape = 'u32[]', space=smem, size = 0x4, offset = 0x4, fixed_abs, tag = 'smem constant byte address 0x4 - core index']
  #allocation1 [shape = 'u32[144,128]{1,0:T(1,128)}', space=vmem, size = 0x12000, scoped, tag = 'internal scratch']
  %s0 = inlined_call_operand.vmem [shape: f32[8,256], index: 0, kind: input, shape index: {}]
  %s1 = inlined_call_operand.vmem [shape: f32[1,255], index: 1, kind: input, shape index: {}]
  %s2 = inlined_call_operand.hbm [shape: f32[1,1,1], index: 2, kind: output, shape index: {0}]
  %s3 = inlined_call_operand.hbm [shape: f32[1,1,1], index: 3, kind: output, shape index: {1}]
  %4 = xla_tuple %s2, %s3
  %s5 = sld [smem:[#allocation0]]
  $region26: #{tv_loss_pallas.1} parent=0
    _
  %s7 = ssub.s32 1, %s5
  %s8 = scalar_select 0, %s7, %s5
  $region1: #{tv_loss_pallas.1} parent=0
    #allocation2 [shape = 'u8[512]{0}', space=vmem, size = 0x400, scoped, tag = 'output window, operand 0, single buffered']
    #allocation3 [shape = 's32[1]{0}', space=sflag, size = 0x4, scoped, tag = 'scoped memory for tv_loss_pallas.1']
    #allocation4 [shape = 'u8[512]{0}', space=vmem, size = 0x400, scoped, tag = 'output window, operand 1, single buffered']
    #allocation5 [shape = 's32[1]{0}', space=sflag, size = 0x4, scoped, tag = 'scoped memory for tv_loss_pallas.1']
    %9 = vsyncpa [#allocation3], 0
    %10 = vsyncpa [#allocation5], 0
    // Predicated region
    $region2: #{tv_loss_pallas.1} parent=1 // pred_check
      _
    $region3: #{tv_loss_pallas.1} parent=1 // pred_check_branch
      %12 = sbr.rel (0) target = $region5
    $region4: #{tv_loss_pallas.1} parent=1 // pred_region
      _
    $region5: #{tv_loss_pallas.1} parent=1 // pred_fallthru
      _
    // Predicated region
    $region6: #{tv_loss_pallas.1} parent=1 // pred_check
      _
    $region7: #{tv_loss_pallas.1} parent=1 // pred_check_branch
      %14 = sbr.rel (0) target = $region9
    $region8: #{tv_loss_pallas.1} parent=1 // pred_region
      _
    $region9: #{tv_loss_pallas.1} parent=1 // pred_fallthru
      _
    %v15 = vld [vmem:[%s0] sm:$0xff]
    %v16 = vld [vmem:[%s0 + $0x8] sm:$0xff]
    %19 = vrot.lane.b32.xlu0 %v15, 16
    %v20 = vpop.permute.xlu0 %19
    %21 = vrot.lane.b32.xlu0 %v16, 16
    %v22 = vpop.permute.xlu0 %21
    %vm23 = vcmask 130048
    %v24 = vsel %vm23, %v20, %v22
    %v27 = vsub.f32 %v15, %v20
    %v28 = vsub.f32 %v16, %v24
    %v29 = vmul.f32 %v27, %v27
    %v30 = vmul.f32 %v28, %v28
    %33 = vrot.lane.b32.xlu0 %v29, 112
    %v34 = vpop.permute.xlu0 %33
    %35 = vrot.lane.b32.xlu0 %v30, 112
    %v36 = vpop.permute.xlu0 %35
    %vm37 = vcmask 916480
    %v38 = vsel %vm37, %v34, %v36
    %v41 = vsel %vm37, %v36, 0.0
    %v42 = vadd.f32 %v38, %v41
    %43 = vadd.xlane.f32.xlu0 %v42
    %v44 = vpop.xlane.xlu0 %43
    %v45 = vrot.slane %v44, 4
    %v46 = vadd.f32 %v44, %v45
    %v47 = vrot.slane %v46, 2
    %v48 = vadd.f32 %v46, %v47
    %v49 = vrot.slane %v48, 1
    %v50 = vadd.f32 %v48, %v49
    %s51 = vtos %v50
    %v52 = vstv %s51
    %vm53 = vcmask 0
    %54 = vst.msk [vmem:[#allocation2] sm:$0x1] %vm53, %v52
    %55 = vrot.lane.b32.xlu0 %v15, 1
    %v56 = vpop.permute.xlu0 %55
    %57 = vrot.lane.b32.xlu0 %v16, 1
    %v58 = vpop.permute.xlu0 %57
    %vm59 = vcmask 7168
    %v60 = vsel %vm59, %v56, %v58
    %v63 = vsub.f32 %v15, %v56
    %v64 = vsub.f32 %v16, %v60
    %v65 = vld [vmem:[%s1] sm:$0x3]
    %v67 = vlaneseq
    %v68 = vshrl.u32 %v67, 7
    %v69 = vsub.s32 0, %v68
    %v70 = vrot.slane %v65, %v69
    %v71 = vlaneseq
    %v72 = vshrl.u32 %v71, 7
    %v73 = vsub.s32 1, %v72
    %v74 = vrot.slane %v65, %v73
    %75 = vrot.lane.b32.xlu0 %v70, 1
    %v76 = vpop.permute.xlu0 %75
    %77 = vrot.lane.b32.xlu0 %v74, 1
    %v78 = vpop.permute.xlu0 %77
    %v79 = vsel %vm59, %v76, %v78
    %v82 = vmul.f32 %v63, %v76
    %v83 = vmul.f32 %v64, %v79
    %v84 = vmul.f32 %v82, %v82
    %v85 = vmul.f32 %v83, %v83
    %88 = vrot.lane.b32.xlu0 %v84, 127
    %v89 = vpop.permute.xlu0 %88
    %90 = vrot.lane.b32.xlu0 %v85, 127
    %v91 = vpop.permute.xlu0 %90
    %vm92 = vcmask 1039360
    %v93 = vsel %vm92, %v89, %v91
    %v96 = vsel %vm92, %v91, 0.0
    %v97 = vadd.f32 %v93, %v96
    %98 = vadd.xlane.f32.xlu0 %v97
    %v99 = vpop.xlane.xlu0 %98
    %v100 = vrot.slane %v99, 4
    %v101 = vadd.f32 %v99, %v100
    %v102 = vrot.slane %v101, 2
    %v103 = vadd.f32 %v101, %v102
    %v104 = vrot.slane %v103, 1
    %v105 = vadd.f32 %v103, %v104
    %s106 = vtos %v105
    %v107 = vstv %s106
    %108 = vst.msk [vmem:[#allocation4] sm:$0x1] %vm53, %v107
    // Predicated region
    $region10: #{tv_loss_pallas.1} parent=1 // pred_check
      _
    $region11: #{tv_loss_pallas.1} parent=1 // pred_check_branch
      %110 = sbr.rel (0) target = $region13
    $region12: #{tv_loss_pallas.1} parent=1 // pred_region
      %s112 = ssub.s32 16, 16
      %113 = vsyncadd [#allocation3], %s112
      %s115 = sshll.u32 [#allocation2], 4
      %s116 = int_to_ptr.vmem [resolvable:$true] %s115
      %118 = dma.vmem_to_hbm [thread:$0]  %s116, 16, %s2, [#allocation3]
    $region13: #{tv_loss_pallas.1} parent=1 // pred_fallthru
      _
    // Predicated region
    $region14: #{tv_loss_pallas.1} parent=1 // pred_check
      _
    $region15: #{tv_loss_pallas.1} parent=1 // pred_check_branch
      %120 = sbr.rel (0) target = $region17
    $region16: #{tv_loss_pallas.1} parent=1 // pred_region
      %s122 = ssub.s32 16, 16
      %123 = vsyncadd [#allocation5], %s122
      %s125 = sshll.u32 [#allocation4], 4
      %s126 = int_to_ptr.vmem [resolvable:$true] %s125
      %128 = dma.vmem_to_hbm [thread:$0]  %s126, 16, %s3, [#allocation5]
    $region17: #{tv_loss_pallas.1} parent=1 // pred_fallthru
      _
    // Predicated region
    $region18: #{tv_loss_pallas.1} parent=1 // pred_check
      _
    $region19: #{tv_loss_pallas.1} parent=1 // pred_check_branch
      %130 = sbr.rel (0) target = $region21
    $region20: #{tv_loss_pallas.1} parent=1 // pred_region
      %131 = dma.done [#allocation3], 16
    $region21: #{tv_loss_pallas.1} parent=1 // pred_fallthru
      _
    // Predicated region
    $region22: #{tv_loss_pallas.1} parent=1 // pred_check
      _
    $region23: #{tv_loss_pallas.1} parent=1 // pred_check_branch
      %133 = sbr.rel (0) target = $region25
    $region24: #{tv_loss_pallas.1} parent=1 // pred_region
      %134 = dma.done [#allocation5], 16
    $region25: #{tv_loss_pallas.1} parent=1 // pred_fallthru
      _
    %135 = vsyncpa [#allocation3], 1
    %136 = vsyncpa [#allocation5], 1

</llo_original>
